<compile_context>
chip_gen: v5e
topology: v5e:2x2
jax: 0.10.0
libtpu: 0.0.40
codegen_flags: <defaults>
</compile_context>

<pallas_src>
import functools

import jax
import jax.numpy as jnp
from jax.experimental import pallas as pl
from jax.experimental.pallas import tpu as pltpu

_VMEM_LIMIT = 32 * 1024 * 1024


# --------------------------------------------------------------------------
# helpers (plain-JAX glue: gaussian window -> band matrices, im2col)
# --------------------------------------------------------------------------
def _gaussian_1d(win, sigma):
    x = jnp.arange(win, dtype=jnp.float32) - win // 2
    g = jnp.exp(-(x * x) / (2.0 * sigma * sigma))
    return g / jnp.sum(g)


def _band_matrix(n, g1d):
    """M[i, j] = g1d[j - i + r]  (zero-padded 'same' 1-D conv as a matmul)."""
    win = g1d.shape[0]
    r = win // 2
    idx = jnp.arange(n)
    diff = idx[None, :] - idx[:, None] + r
    valid = (diff >= 0) & (diff < win)
    return jnp.where(valid, g1d[jnp.clip(diff, 0, win - 1)], 0.0).astype(jnp.float32)


def _im2col_t(x, k, stride, pad):
    """x: [C, B, H, W] (channel-major) -> patches [C*k*k, B*Ho*Wo]."""
    C, B, H, W = x.shape
    xp = jnp.pad(x, ((0, 0), (0, 0), (pad, pad), (pad, pad)))
    Ho = (H + 2 * pad - k) // stride + 1
    Wo = (W + 2 * pad - k) // stride + 1
    cols = []
    for i in range(k):
        for j in range(k):
            cols.append(xp[:, :, i:i + stride * Ho:stride, j:j + stride * Wo:stride])
    p = jnp.stack(cols, axis=1)                       # [C, k*k, B, Ho, Wo]
    p = p.reshape(C * k * k, B * Ho * Wo)             # K index = c*k*k + i*k + j
    return p.astype(jnp.float32), Ho, Wo


def _round_up(x, m):
    return -(-x // m) * m


def _choose_group(N, H, W, budget_bytes=2 << 20, max_lanes=1024):
    """Largest divisor of N whose [H, nt*W] f32 slab fits the budget; prefer
    >=2 grid steps so the image axis can shard across TensorCores (v7x)."""
    best = 1
    for nt in range(1, N + 1):
        if N % nt:
            continue
        if nt * W > max_lanes or nt * H * W * 4 > budget_bytes:
            break
        best = nt
    if best == N and N > 1:
        divs = [d for d in range(1, N) if N % d == 0]
        if divs:
            best = max(divs)
    return best


# --------------------------------------------------------------------------
# Fused SSIM + PSNR kernel.
# One grid step handles NT images laid side-by-side as [H, NT*W] (lane-dense
# blur matmuls on the MXU).  The W-direction blur is a right-multiply by the
# block-diagonal band matrix; per-image reductions use a group-sum matrix.
# Outputs: per-image SSIM-map sums and per-image squared-error sums (the
# PSNR pass is fused so preds/targets are read from HBM only once).
# --------------------------------------------------------------------------
def _ssim_psnr_kernel(x_ref, y_ref, gh_ref, gwb_ref, gsum_ref, ssim_ref, sse_ref):
    x = x_ref[0]                      # [H, NT*W] f32
    y = y_ref[0]
    gh = gh_ref[...]                  # [H, H]
    gwb = gwb_ref[...]                # [NT*W, NT*W] block-diagonal
    gs = gsum_ref[...]                # [NT*W, NT] per-image group-sum

    def blur(a):
        t = jnp.dot(gh, a, preferred_element_type=jnp.float32)
        return jnp.dot(t, gwb, preferred_element_type=jnp.float32)

    c1 = jnp.float32(0.01 ** 2)
    c2 = jnp.float32(0.03 ** 2)
    mu1 = blur(x)
    mu2 = blur(y)
    mu1_sq = mu1 * mu1
    mu2_sq = mu2 * mu2
    mu12 = mu1 * mu2
    s1 = blur(x * x) - mu1_sq
    s2 = blur(y * y) - mu2_sq
    s12 = blur(x * y) - mu12
    num = (2.0 * mu12 + c1) * (2.0 * s12 + c2)
    den = (mu1_sq + mu2_sq + c1) * (s1 + s2 + c2)
    smap = num / den                                               # [H, NT*W]

    ssim_ref[0] = jnp.dot(jnp.sum(smap, axis=0, keepdims=True), gs,
                          preferred_element_type=jnp.float32)      # [1, NT]
    d = x - y
    sse_ref[0] = jnp.dot(jnp.sum(d * d, axis=0, keepdims=True), gs,
                         preferred_element_type=jnp.float32)       # [1, NT]


def ssim_psnr_pallas(preds, targets, win=11, sigma=1.5, data_range=1.0):
    """Returns (scalar mean SSIM, per-image PSNR [B])."""
    B, C, H, W = preds.shape
    N = B * C
    nt = _choose_group(N, H, W)
    ng = N // nt

    def wide(z):
        z = z.astype(jnp.float32).reshape(ng, nt, H, W)
        return jnp.transpose(z, (0, 2, 1, 3)).reshape(ng, H, nt * W)

    x = wide(preds)
    y = wide(targets)

    g = _gaussian_1d(win, sigma)
    gh = _band_matrix(H, g)
    gw = _band_matrix(W, g)                                 # symmetric
    gwb = jnp.kron(jnp.eye(nt, dtype=jnp.float32), gw)      # block-diag [nt*W, nt*W]
    gs = (jnp.arange(nt * W)[:, None] // W ==
          jnp.arange(nt)[None, :]).astype(jnp.float32)      # [nt*W, nt]

    ssim_sum, sse = pl.pallas_call(
        _ssim_psnr_kernel,
        out_shape=(jax.ShapeDtypeStruct((ng, 1, nt), jnp.float32),
                   jax.ShapeDtypeStruct((ng, 1, nt), jnp.float32)),
        grid=(ng,),
        in_specs=[
            pl.BlockSpec((1, H, nt * W), lambda i: (i, 0, 0)),
            pl.BlockSpec((1, H, nt * W), lambda i: (i, 0, 0)),
            pl.BlockSpec((H, H), lambda i: (0, 0)),
            pl.BlockSpec((nt * W, nt * W), lambda i: (0, 0)),
            pl.BlockSpec((nt * W, nt), lambda i: (0, 0)),
        ],
        out_specs=(pl.BlockSpec((1, 1, nt), lambda i: (i, 0, 0)),
                   pl.BlockSpec((1, 1, nt), lambda i: (i, 0, 0))),
        compiler_params=pltpu.CompilerParams(
            dimension_semantics=("parallel",),
            vmem_limit_bytes=_VMEM_LIMIT),
    )(x, y, gh, gwb, gs)

    ssim_per_img = ssim_sum.reshape(N) / jnp.float32(H * W)        # [B*C]
    mse_per_b = sse.reshape(B, C).sum(axis=1) / jnp.float32(C * H * W)
    psnr_per_b = 10.0 * jnp.log10((data_range * data_range) / mse_per_b)
    return jnp.mean(ssim_per_img), psnr_per_b


def ssim_pallas(preds, targets, win=11, sigma=1.5):
    return ssim_psnr_pallas(preds, targets, win=win, sigma=sigma)[0]


def psnr_pallas(preds, targets):
    return ssim_psnr_pallas(preds, targets)[1]


# --------------------------------------------------------------------------
# LPIPS (synthetic backbone): im2col GEMM with lane-dense [Cout, M] output,
# tiled over M (parallel grid), bf16 operands / f32 accumulation.
# --------------------------------------------------------------------------
def _gemm_bias_relu_kernel(w_ref, p_ref, b_ref, o_ref):
    acc = jnp.dot(w_ref[...], p_ref[...], preferred_element_type=jnp.float32)
    acc = acc + b_ref[...]                         # [Cout, 1] broadcast over lanes
    o_ref[...] = jnp.maximum(acc, 0.0)


def conv2d_relu_pallas(x_cbhw, w, b, stride, pad):
    """x: [Cin, B, H, W] (channel-major); w: [Cout, Cin, k, k]; b: [Cout].
    Returns features [Cout, B, Ho, Wo] (channel-major, no transposes)."""
    Cin, Bb, H, W = x_cbhw.shape
    Cout, _, k, _ = w.shape
    patches, Ho, Wo = _im2col_t(x_cbhw, k, stride, pad)          # [K, M]
    K, M = patches.shape
    wm = w.reshape(Cout, K).astype(jnp.float32)                  # [Cout, K]
    bm = b.reshape(Cout, 1).astype(jnp.float32)

    # pad K so bf16 operands tile cleanly, then cast (f32 accumulate in-kernel)
    Kp = _round_up(K, 32)
    if Kp != K:
        patches = jnp.pad(patches, ((0, Kp - K), (0, 0)))
        wm = jnp.pad(wm, ((0, 0), (0, Kp - K)))
    pm = patches.astype(jnp.bfloat16)
    wm = wm.astype(jnp.bfloat16)

    mt = 128 if M % 128 == 0 else M                              # lane-dense tiles
    out = pl.pallas_call(
        _gemm_bias_relu_kernel,
        out_shape=jax.ShapeDtypeStruct((Cout, M), jnp.float32),
        grid=(M // mt,),
        in_specs=[
            pl.BlockSpec((Cout, Kp), lambda i: (0, 0)),
            pl.BlockSpec((Kp, mt), lambda i: (0, i)),
            pl.BlockSpec((Cout, 1), lambda i: (0, 0)),
        ],
        out_specs=pl.BlockSpec((Cout, mt), lambda i: (0, i)),
        compiler_params=pltpu.CompilerParams(
            dimension_semantics=("parallel",),
            vmem_limit_bytes=_VMEM_LIMIT),
    )(wm, pm, bm)
    return out.reshape(Cout, Bb, Ho, Wo)


def _lpips_layer_kernel(f1_ref, f2_ref, w_ref, o_ref):
    eps = jnp.float32(1e-10)
    f1 = f1_ref[0]                                 # [C, HW]
    f2 = f2_ref[0]
    w = w_ref[...]                                 # [C, 1]
    n1 = f1 * jax.lax.rsqrt(jnp.sum(f1 * f1, axis=0, keepdims=True) + eps)
    n2 = f2 * jax.lax.rsqrt(jnp.sum(f2 * f2, axis=0, keepdims=True) + eps)
    d = (n1 - n2) * (n1 - n2)                      # [C, HW]
    s = jnp.sum(d * w, axis=0, keepdims=True)      # [1, HW]
    o_ref[0] = jnp.sum(s, axis=1, keepdims=True)   # [1, 1]  (sum; /HW on host)


def lpips_layer_score(f1, f2, w):
    """f1/f2: [B, C, HW]; w: [C] (non-negative head weights). -> [B]"""
    B, C, HW = f1.shape
    wc = w.reshape(C, 1).astype(jnp.float32)
    out = pl.pallas_call(
        _lpips_layer_kernel,
        out_shape=jax.ShapeDtypeStruct((B, 1, 1), jnp.float32),
        grid=(B,),
        in_specs=[
            pl.BlockSpec((1, C, HW), lambda b: (b, 0, 0)),
            pl.BlockSpec((1, C, HW), lambda b: (b, 0, 0)),
            pl.BlockSpec((C, 1), lambda b: (0, 0)),
        ],
        out_specs=pl.BlockSpec((1, 1, 1), lambda b: (b, 0, 0)),
        compiler_params=pltpu.CompilerParams(
            dimension_semantics=("parallel",),
            vmem_limit_bytes=_VMEM_LIMIT),
    )(f1, f2, wc)
    return out.reshape(B) / jnp.float32(HW)


def init_lpips_params(key, in_ch=3):
    k1, k2, k3, k4, k5, k6 = jax.random.split(key, 6)
    c1, c2 = 8, 16
    return {
        "conv1_w": 0.1 * jax.random.normal(k1, (c1, in_ch, 3, 3), jnp.float32),
        "conv1_b": 0.01 * jax.random.normal(k2, (c1,), jnp.float32),
        "conv2_w": 0.1 * jax.random.normal(k3, (c2, c1, 3, 3), jnp.float32),
        "conv2_b": 0.01 * jax.random.normal(k4, (c2,), jnp.float32),
        "lin1_w": jnp.abs(jax.random.normal(k5, (c1,), jnp.float32)),
        "lin2_w": jnp.abs(jax.random.normal(k6, (c2,), jnp.float32)),
        "shift": jnp.array([-0.030, -0.088, -0.188], jnp.float32).reshape(1, 3, 1, 1),
        "scale": jnp.array([0.458, 0.448, 0.450], jnp.float32).reshape(1, 3, 1, 1),
    }


def _to_b_c_hw(feat):
    """[C, B, Ho, Wo] -> [B, C, Ho*Wo] (small leading-axis swap)."""
    C, Bb, Ho, Wo = feat.shape
    return jnp.transpose(feat, (1, 0, 2, 3)).reshape(Bb, C, Ho * Wo)


def lpips_pallas(preds, targets, params):
    B = preds.shape[0]

    def prep(x):
        x = (x.astype(jnp.float32) - params["shift"]) / params["scale"]
        return jnp.transpose(x, (1, 0, 2, 3))                # [C, B, H, W]

    # preds and targets share the conv calls (one GEMM per layer for both)
    xb = jnp.concatenate([prep(preds), prep(targets)], axis=1)    # [C, 2B, H, W]
    f1 = conv2d_relu_pallas(xb, params["conv1_w"], params["conv1_b"], stride=1, pad=1)
    f2 = conv2d_relu_pallas(f1, params["conv2_w"], params["conv2_b"], stride=2, pad=1)

    f1b = _to_b_c_hw(f1)                                          # [2B, C1, HW]
    f2b = _to_b_c_hw(f2)                                          # [2B, C2, HW/4]
    s = lpips_layer_score(f1b[:B], f1b[B:], params["lin1_w"]) + \
        lpips_layer_score(f2b[:B], f2b[B:], params["lin2_w"])
    return s                                                      # [B]


# --------------------------------------------------------------------------
# ReconMetrics equivalent
# --------------------------------------------------------------------------
class ReconMetricsPallas:
    def __init__(self, lpips_params):
        self.params = lpips_params
        self.metrics = {
            "ssim": lambda p, t: ssim_psnr_pallas(p, t)[0],
            "psnr": lambda p, t: ssim_psnr_pallas(p, t)[1],
            "lpips": functools.partial(lpips_pallas, params=lpips_params),
        }

    def __call__(self, preds, targets):
        # fused: preds/targets read once for both SSIM and PSNR
        ssim_mean, psnr_b = ssim_psnr_pallas(preds, targets)
        lp = lpips_pallas(preds, targets, self.params)
        return {"ssim": ssim_mean,
                "psnr": jnp.mean(psnr_b),
                "lpips": jnp.mean(lp)}

    def compute(self, preds, targets, metric="psnr"):
        return self.metrics[metric](preds, targets)

    def metrics_name(self):
        return list(self.metrics.keys())


if __name__ == "__main__":
    key = jax.random.PRNGKey(0)
    k_p, k_t, k_w = jax.random.split(key, 3)
    B, C, H, W = 2, 3, 16, 16
    preds = jax.random.uniform(k_p, (B, C, H, W), jnp.float32)
    targets = jax.random.uniform(k_t, (B, C, H, W), jnp.float32)

    params = init_lpips_params(k_w, in_ch=C)
    model = ReconMetricsPallas(params)

    out = model(preds, targets)
    for v in out.values():
        jax.block_until_ready(v)
    print("KERNEL_OK")
</pallas_src>

<mosaic_0001>
module attributes {stable_mosaic.version = 11 : i64} {
  func.func @_ssim_psnr_kernel(%arg0: i32, %arg1: memref<1x16x48xf32, #tpu.memory_space<vmem>>, %arg2: memref<1x16x48xf32, #tpu.memory_space<vmem>>, %arg3: memref<16x16xf32, #tpu.memory_space<vmem>>, %arg4: memref<48x48xf32, #tpu.memory_space<vmem>>, %arg5: memref<48x3xf32, #tpu.memory_space<vmem>>, %arg6: memref<1x1x3xf32, #tpu.memory_space<vmem>>, %arg7: memref<1x1x3xf32, #tpu.memory_space<vmem>>) attributes {dimension_semantics = [#tpu.dimension_semantics<parallel>], iteration_bounds = array<i64: 2>, scalar_prefetch = 0 : i64, scratch_operands = 0 : i64, tpu.core_type = #tpu.core_type<tc>, window_params = [{transform_indices = @transform_0, window_bounds = array<i64: 1, 16, 48>}, {transform_indices = @transform_1, window_bounds = array<i64: 1, 16, 48>}, {pipeline_mode = #tpu.pipeline_mode<synchronous>, transform_indices = @transform_2, window_bounds = array<i64: 16, 16>}, {pipeline_mode = #tpu.pipeline_mode<synchronous>, transform_indices = @transform_3, window_bounds = array<i64: 48, 48>}, {pipeline_mode = #tpu.pipeline_mode<synchronous>, transform_indices = @transform_4, window_bounds = array<i64: 48, 3>}, {transform_indices = @transform_5, window_bounds = array<i64: 1, 1, 3>}, {transform_indices = @transform_6, window_bounds = array<i64: 1, 1, 3>}]} {
    %c0 = arith.constant 0 : index
    %c0_0 = arith.constant 0 : index
    %c0_1 = arith.constant 0 : index
    %0 = vector.load %arg1[%c0, %c0_0, %c0_1] : memref<1x16x48xf32, #tpu.memory_space<vmem>>, vector<1x16x48xf32>
    %1 = vector.shape_cast %0 : vector<1x16x48xf32> to vector<16x48xf32>
    %c0_2 = arith.constant 0 : index
    %c0_3 = arith.constant 0 : index
    %c0_4 = arith.constant 0 : index
    %2 = vector.load %arg2[%c0_2, %c0_3, %c0_4] : memref<1x16x48xf32, #tpu.memory_space<vmem>>, vector<1x16x48xf32>
    %3 = vector.shape_cast %2 : vector<1x16x48xf32> to vector<16x48xf32>
    %c0_5 = arith.constant 0 : index
    %c0_6 = arith.constant 0 : index
    %4 = vector.load %arg3[%c0_5, %c0_6] : memref<16x16xf32, #tpu.memory_space<vmem>>, vector<16x16xf32>
    %c0_7 = arith.constant 0 : index
    %c0_8 = arith.constant 0 : index
    %5 = vector.load %arg4[%c0_7, %c0_8] : memref<48x48xf32, #tpu.memory_space<vmem>>, vector<48x48xf32>
    %c0_9 = arith.constant 0 : index
    %c0_10 = arith.constant 0 : index
    %6 = vector.load %arg5[%c0_9, %c0_10] : memref<48x3xf32, #tpu.memory_space<vmem>>, vector<48x3xf32>
    %cst = arith.constant dense<0.000000e+00> : vector<16x48xf32>
    %7 = tpu.matmul %4, %1, %cst {dimension_numbers = #tpu.dot_dimension_numbers<[1], [0], [0], [1], [0, 0, 1, 1], [], []>} : vector<16x16xf32>, vector<16x48xf32>, vector<16x48xf32> -> vector<16x48xf32>
    %cst_11 = arith.constant dense<0.000000e+00> : vector<16x48xf32>
    %8 = tpu.matmul %7, %5, %cst_11 {dimension_numbers = #tpu.dot_dimension_numbers<[1], [0], [0], [1], [0, 0, 1, 1], [], []>} : vector<16x48xf32>, vector<48x48xf32>, vector<16x48xf32> -> vector<16x48xf32>
    %cst_12 = arith.constant dense<0.000000e+00> : vector<16x48xf32>
    %9 = tpu.matmul %4, %3, %cst_12 {dimension_numbers = #tpu.dot_dimension_numbers<[1], [0], [0], [1], [0, 0, 1, 1], [], []>} : vector<16x16xf32>, vector<16x48xf32>, vector<16x48xf32> -> vector<16x48xf32>
    %cst_13 = arith.constant dense<0.000000e+00> : vector<16x48xf32>
    %10 = tpu.matmul %9, %5, %cst_13 {dimension_numbers = #tpu.dot_dimension_numbers<[1], [0], [0], [1], [0, 0, 1, 1], [], []>} : vector<16x48xf32>, vector<48x48xf32>, vector<16x48xf32> -> vector<16x48xf32>
    %11 = arith.mulf %8, %8 : vector<16x48xf32>
    %12 = arith.mulf %10, %10 : vector<16x48xf32>
    %13 = arith.mulf %8, %10 : vector<16x48xf32>
    %14 = arith.mulf %1, %1 : vector<16x48xf32>
    %cst_14 = arith.constant dense<0.000000e+00> : vector<16x48xf32>
    %15 = tpu.matmul %4, %14, %cst_14 {dimension_numbers = #tpu.dot_dimension_numbers<[1], [0], [0], [1], [0, 0, 1, 1], [], []>} : vector<16x16xf32>, vector<16x48xf32>, vector<16x48xf32> -> vector<16x48xf32>
    %cst_15 = arith.constant dense<0.000000e+00> : vector<16x48xf32>
    %16 = tpu.matmul %15, %5, %cst_15 {dimension_numbers = #tpu.dot_dimension_numbers<[1], [0], [0], [1], [0, 0, 1, 1], [], []>} : vector<16x48xf32>, vector<48x48xf32>, vector<16x48xf32> -> vector<16x48xf32>
    %17 = arith.subf %16, %11 : vector<16x48xf32>
    %18 = arith.mulf %3, %3 : vector<16x48xf32>
    %cst_16 = arith.constant dense<0.000000e+00> : vector<16x48xf32>
    %19 = tpu.matmul %4, %18, %cst_16 {dimension_numbers = #tpu.dot_dimension_numbers<[1], [0], [0], [1], [0, 0, 1, 1], [], []>} : vector<16x16xf32>, vector<16x48xf32>, vector<16x48xf32> -> vector<16x48xf32>
    %cst_17 = arith.constant dense<0.000000e+00> : vector<16x48xf32>
    %20 = tpu.matmul %19, %5, %cst_17 {dimension_numbers = #tpu.dot_dimension_numbers<[1], [0], [0], [1], [0, 0, 1, 1], [], []>} : vector<16x48xf32>, vector<48x48xf32>, vector<16x48xf32> -> vector<16x48xf32>
    %21 = arith.subf %20, %12 : vector<16x48xf32>
    %22 = arith.mulf %1, %3 : vector<16x48xf32>
    %cst_18 = arith.constant dense<0.000000e+00> : vector<16x48xf32>
    %23 = tpu.matmul %4, %22, %cst_18 {dimension_numbers = #tpu.dot_dimension_numbers<[1], [0], [0], [1], [0, 0, 1, 1], [], []>} : vector<16x16xf32>, vector<16x48xf32>, vector<16x48xf32> -> vector<16x48xf32>
    %cst_19 = arith.constant dense<0.000000e+00> : vector<16x48xf32>
    %24 = tpu.matmul %23, %5, %cst_19 {dimension_numbers = #tpu.dot_dimension_numbers<[1], [0], [0], [1], [0, 0, 1, 1], [], []>} : vector<16x48xf32>, vector<48x48xf32>, vector<16x48xf32> -> vector<16x48xf32>
    %25 = arith.subf %24, %13 : vector<16x48xf32>
    %cst_20 = arith.constant 2.000000e+00 : f32
    %26 = vector.broadcast %cst_20 : f32 to vector<16x48xf32>
    %27 = arith.mulf %26, %13 : vector<16x48xf32>
    %cst_21 = arith.constant 9.99999974E-5 : f32
    %28 = vector.broadcast %cst_21 : f32 to vector<16x48xf32>
    %29 = arith.addf %27, %28 : vector<16x48xf32>
    %cst_22 = arith.constant 2.000000e+00 : f32
    %30 = vector.broadcast %cst_22 : f32 to vector<16x48xf32>
    %31 = arith.mulf %30, %25 : vector<16x48xf32>
    %cst_23 = arith.constant 8.99999984E-4 : f32
    %32 = vector.broadcast %cst_23 : f32 to vector<16x48xf32>
    %33 = arith.addf %31, %32 : vector<16x48xf32>
    %34 = arith.mulf %29, %33 : vector<16x48xf32>
    %35 = arith.addf %11, %12 : vector<16x48xf32>
    %cst_24 = arith.constant 9.99999974E-5 : f32
    %36 = vector.broadcast %cst_24 : f32 to vector<16x48xf32>
    %37 = arith.addf %35, %36 : vector<16x48xf32>
    %38 = arith.addf %17, %21 : vector<16x48xf32>
    %cst_25 = arith.constant 8.99999984E-4 : f32
    %39 = vector.broadcast %cst_25 : f32 to vector<16x48xf32>
    %40 = arith.addf %38, %39 : vector<16x48xf32>
    %41 = arith.mulf %37, %40 : vector<16x48xf32>
    %42 = arith.divf %34, %41 : vector<16x48xf32>
    %cst_26 = arith.constant dense<0.000000e+00> : vector<48xf32>
    %43 = vector.multi_reduction <add>, %42, %cst_26 [0] : vector<16x48xf32> to vector<48xf32>
    %44 = vector.shape_cast %43 : vector<48xf32> to vector<1x48xf32>
    %cst_27 = arith.constant dense<0.000000e+00> : vector<1x3xf32>
    %45 = tpu.matmul %44, %6, %cst_27 {dimension_numbers = #tpu.dot_dimension_numbers<[1], [0], [0], [1], [0, 0, 1, 1], [], []>} : vector<1x48xf32>, vector<48x3xf32>, vector<1x3xf32> -> vector<1x3xf32>
    %c0_28 = arith.constant 0 : index
    %c0_29 = arith.constant 0 : index
    %c0_30 = arith.constant 0 : index
    %46 = vector.load %arg6[%c0_28, %c0_29, %c0_30] : memref<1x1x3xf32, #tpu.memory_space<vmem>>, vector<1x1x3xf32>
    %47 = vector.shape_cast %46 : vector<1x1x3xf32> to vector<1x3xf32>
    %48 = vector.shape_cast %45 : vector<1x3xf32> to vector<1x1x3xf32>
    tpu.vector_store %arg6[%c0_28, %c0_29, %c0_30], %48 {strides = array<i32>} : memref<1x1x3xf32, #tpu.memory_space<vmem>>, vector<1x1x3xf32>,
    %49 = arith.subf %1, %3 : vector<16x48xf32>
    %50 = arith.mulf %49, %49 : vector<16x48xf32>
    %cst_31 = arith.constant dense<0.000000e+00> : vector<48xf32>
    %51 = vector.multi_reduction <add>, %50, %cst_31 [0] : vector<16x48xf32> to vector<48xf32>
    %52 = vector.shape_cast %51 : vector<48xf32> to vector<1x48xf32>
    %cst_32 = arith.constant dense<0.000000e+00> : vector<1x3xf32>
    %53 = tpu.matmul %52, %6, %cst_32 {dimension_numbers = #tpu.dot_dimension_numbers<[1], [0], [0], [1], [0, 0, 1, 1], [], []>} : vector<1x48xf32>, vector<48x3xf32>, vector<1x3xf32> -> vector<1x3xf32>
    %c0_33 = arith.constant 0 : index
    %c0_34 = arith.constant 0 : index
    %c0_35 = arith.constant 0 : index
    %54 = vector.load %arg7[%c0_33, %c0_34, %c0_35] : memref<1x1x3xf32, #tpu.memory_space<vmem>>, vector<1x1x3xf32>
    %55 = vector.shape_cast %54 : vector<1x1x3xf32> to vector<1x3xf32>
    %56 = vector.shape_cast %53 : vector<1x3xf32> to vector<1x1x3xf32>
    tpu.vector_store %arg7[%c0_33, %c0_34, %c0_35], %56 {strides = array<i32>} : memref<1x1x3xf32, #tpu.memory_space<vmem>>, vector<1x1x3xf32>,
    return
  }
  func.func @transform_0(%arg0: i32) -> (i32, i32, i32) {
    %c0_i32 = arith.constant 0 : i32
    %c0_i32_0 = arith.constant 0 : i32
    %c0_i32_1 = arith.constant 0 : i32
    return %arg0, %c0_i32, %c0_i32_0 : i32, i32, i32
  }
  func.func @transform_1(%arg0: i32) -> (i32, i32, i32) {
    %c0_i32 = arith.constant 0 : i32
    %c0_i32_0 = arith.constant 0 : i32
    %c0_i32_1 = arith.constant 0 : i32
    return %arg0, %c0_i32, %c0_i32_0 : i32, i32, i32
  }
  func.func @transform_2(%arg0: i32) -> (i32, i32) {
    %c0_i32 = arith.constant 0 : i32
    %c0_i32_0 = arith.constant 0 : i32
    %c0_i32_1 = arith.constant 0 : i32
    return %c0_i32, %c0_i32_0 : i32, i32
  }
  func.func @transform_3(%arg0: i32) -> (i32, i32) {
    %c0_i32 = arith.constant 0 : i32
    %c0_i32_0 = arith.constant 0 : i32
    %c0_i32_1 = arith.constant 0 : i32
    return %c0_i32, %c0_i32_0 : i32, i32
  }
  func.func @transform_4(%arg0: i32) -> (i32, i32) {
    %c0_i32 = arith.constant 0 : i32
    %c0_i32_0 = arith.constant 0 : i32
    %c0_i32_1 = arith.constant 0 : i32
    return %c0_i32, %c0_i32_0 : i32, i32
  }
  func.func @transform_5(%arg0: i32) -> (i32, i32, i32) {
    %c0_i32 = arith.constant 0 : i32
    %c0_i32_0 = arith.constant 0 : i32
    %c0_i32_1 = arith.constant 0 : i32
    return %arg0, %c0_i32, %c0_i32_0 : i32, i32, i32
  }
  func.func @transform_6(%arg0: i32) -> (i32, i32, i32) {
    %c0_i32 = arith.constant 0 : i32
    %c0_i32_0 = arith.constant 0 : i32
    %c0_i32_1 = arith.constant 0 : i32
    return %arg0, %c0_i32, %c0_i32_0 : i32, i32, i32
  }
}

</mosaic_0001>

<llo_original>
// kernel: tpu_custom_call.1
$region0: #{tpu_custom_call.1}
  #allocation0 [shape = 'u32[]', space=smem, size = 0x4, offset = 0x4, fixed_abs, tag = 'smem constant byte address 0x4 - core index']
  #allocation1 [shape = 'u32[72,128]{1,0:T(1,128)}', space=vmem, size = 0x9000, scoped, tag = 'internal scratch']
  %s0 = inlined_call_operand.hbm [shape: f32[2,16,48], index: 0, kind: input, shape index: {}]
  %s1 = inlined_call_operand.hbm [shape: f32[2,16,48], index: 1, kind: input, shape index: {}]
  %s2 = inlined_call_operand.hbm [shape: f32[16,16], index: 2, kind: input, shape index: {}]
  %s3 = inlined_call_operand.vmem [shape: f32[48,48], index: 3, kind: input, shape index: {}]
  %s4 = inlined_call_operand.vmem [shape: f32[48,3], index: 4, kind: input, shape index: {}]
  %s5 = inlined_call_operand.hbm [shape: f32[2,1,3], index: 5, kind: output, shape index: {0}]
  %s6 = inlined_call_operand.hbm [shape: f32[2,1,3], index: 6, kind: output, shape index: {1}]
  %7 = xla_tuple %s5, %s6
  %s8 = sld [smem:[#allocation0]]
  $region73: #{tpu_custom_call.1} parent=0
    _
  %s10 = ssub.s32 1, %s8
  %s11 = scalar_select 0, %s10, %s8
  $region1: #{tpu_custom_call.1} parent=0
    #allocation2 [shape = 'u8[16384]{0}', space=vmem, size = 0x4000, scoped, tag = 'input window, operand 0']
    #allocation3 [shape = 's32[2]{0}', space=sflag, size = 0x8, scoped, tag = 'scoped memory for tpu_custom_call.1']
    #allocation4 [shape = 's32[2]{0}', space=sflag, size = 0x8, scoped, tag = 'scoped memory for tpu_custom_call.1']
    #allocation5 [shape = 'u8[16384]{0}', space=vmem, size = 0x4000, scoped, tag = 'input window, operand 1']
    #allocation6 [shape = 's32[2]{0}', space=sflag, size = 0x8, scoped, tag = 'scoped memory for tpu_custom_call.1']
    #allocation7 [shape = 'u8[8192]{0}', space=vmem, size = 0x2000, scoped, tag = 'input window, operand 2, single buffered']
    #allocation8 [shape = 'u8[1024]{0}', space=vmem, size = 0x400, scoped, tag = 'output window, operand 0']
    #allocation9 [shape = 'u8[1024]{0}', space=vmem, size = 0x400, scoped, tag = 'output window, operand 1']
    #allocation10 [shape = 's32[2]{0}', space=sflag, size = 0x8, scoped, tag = 'scoped memory for tpu_custom_call.1']
    %12 = vsyncpa [#allocation3], 0
    %s13 = scalar_lea.sflag [#allocation3], 1
    %14 = vsyncpa %s13, 0
    %15 = vsyncpa [#allocation6], 0
    %s16 = scalar_lea.sflag [#allocation6], 1
    %17 = vsyncpa %s16, 0
    %18 = vsyncpa [#allocation4], 0
    %s19 = scalar_lea.sflag [#allocation4], 1
    %20 = vsyncpa %s19, 0
    %21 = vsyncpa [#allocation10], 0
    %s22 = scalar_lea.sflag [#allocation10], 1
    %23 = vsyncpa %s22, 0
    loop: start=0, step=1, limit=4
    $region2: #{tpu_custom_call.1} parent=1 // loop_pre_header
      _
    $region3: #{tpu_custom_call.1} parent=1 // loop_header
      %s25 = sphi 0, %s29
      %p26 = scmp.ge.s32.totalorder %s25, 4
      %s35 = sphi 0, %s37
      %s38 = sphi 0, %s35
      %s39 = sphi 0, %s38
      %s55 = sphi 0, %s39
      %s61 = sphi 0, %s63
      %s64 = sphi 0, %s61
      %s65 = sphi 0, %s64
      %s81 = sphi 0, %s65
      %s85 = sphi 0, %s85
      %s87 = sphi 0, %s85
      %s88 = sphi 0, %s87
      %s102 = sphi 0, %s88
      %s106 = sphi 0, %s106
      %s108 = sphi 0, %s106
      %s109 = sphi 0, %s108
      %s123 = sphi 0, %s109
      %s127 = sphi 0, %s127
      %s129 = sphi 0, %s127
      %s130 = sphi 0, %s129
      %s144 = sphi 0, %s130
      %s150 = sphi 0, %s152
      %s153 = sphi 0, %s150
      %s154 = sphi 0, %s153
      %s170 = sphi 0, %s154
      %s176 = sphi 0, %s178
      %s179 = sphi 0, %s176
      %s180 = sphi 0, %s179
      %s196 = sphi 0, %s180
    $region4: #{tpu_custom_call.1} parent=1 // loop_header_branch
      %28 = sbr.rel (%p26) target = $region8
    $region5: #{tpu_custom_call.1} parent=1 // loop_body
      %s30 = ssub.s32 %s25, 1
      %s31 = ssub.s32 %s25, 2
      %s32 = sadd.s32 %s25, 1
      %s33 = ssub.s32 %s25, %s32
      %p34 = scmp.eq.s32.totalorder %s33, 0
      %s36 = sadd.s32 %s35, 1
      %s37 = scalar_select %p34, %s35, %s36
      %p40 = pneg %p34
      %p41 = scmp.eq.s32.totalorder %s25, 1
      %p42 = por %p40, %p41
      %p43 = scmp.ne.s32.totalorder %s35, %s38
      %p44 = scmp.eq.s32.totalorder %s25, 0
      %p45 = por %p43, %p44
      %p46 = scmp.ne.s32.totalorder %s35, %s38
      %p47 = scmp.eq.s32.totalorder %s30, 1
      %p48 = por %p46, %p47
      %p49 = scmp.ne.s32.totalorder %s38, %s39
      %p50 = scmp.eq.s32.totalorder %s30, 0
      %p51 = por %p49, %p50
      %p52 = scmp.ne.s32.totalorder %s38, %s39
      %p53 = scmp.eq.s32.totalorder %s31, 1
      %p54 = por %p52, %p53
      %p56 = scmp.ne.s32.totalorder %s39, %s55
      %p57 = scmp.eq.s32.totalorder %s31, 0
      %p58 = por %p56, %p57
      %s59 = ssub.s32 %s25, %s32
      %p60 = scmp.eq.s32.totalorder %s59, 0
      %s62 = sadd.s32 %s61, 1
      %s63 = scalar_select %p60, %s61, %s62
      %p66 = pneg %p60
      %p67 = scmp.eq.s32.totalorder %s25, 1
      %p68 = por %p66, %p67
      %p69 = scmp.ne.s32.totalorder %s61, %s64
      %p70 = scmp.eq.s32.totalorder %s25, 0
      %p71 = por %p69, %p70
      %p72 = scmp.ne.s32.totalorder %s61, %s64
      %p73 = scmp.eq.s32.totalorder %s30, 1
      %p74 = por %p72, %p73
      %p75 = scmp.ne.s32.totalorder %s64, %s65
      %p76 = scmp.eq.s32.totalorder %s30, 0
      %p77 = por %p75, %p76
      %p78 = scmp.ne.s32.totalorder %s64, %s65
      %p79 = scmp.eq.s32.totalorder %s31, 1
      %p80 = por %p78, %p79
      %p82 = scmp.ne.s32.totalorder %s65, %s81
      %p83 = scmp.eq.s32.totalorder %s31, 0
      %p84 = por %p82, %p83
      %s86 = sadd.s32 %s85, 1
      %p89 = scmp.eq.s32.totalorder %s25, 1
      %p90 = scmp.ne.s32.totalorder %s85, %s87
      %p91 = scmp.eq.s32.totalorder %s25, 0
      %p92 = por %p90, %p91
      %p93 = scmp.ne.s32.totalorder %s85, %s87
      %p94 = scmp.eq.s32.totalorder %s30, 1
      %p95 = por %p93, %p94
      %p96 = scmp.ne.s32.totalorder %s87, %s88
      %p97 = scmp.eq.s32.totalorder %s30, 0
      %p98 = por %p96, %p97
      %p99 = scmp.ne.s32.totalorder %s87, %s88
      %p100 = scmp.eq.s32.totalorder %s31, 1
      %p101 = por %p99, %p100
      %p103 = scmp.ne.s32.totalorder %s88, %s102
      %p104 = scmp.eq.s32.totalorder %s31, 0
      %p105 = por %p103, %p104
      %s107 = sadd.s32 %s106, 1
      %p110 = scmp.eq.s32.totalorder %s25, 1
      %p111 = scmp.ne.s32.totalorder %s106, %s108
      %p112 = scmp.eq.s32.totalorder %s25, 0
      %p113 = por %p111, %p112
      %p114 = scmp.ne.s32.totalorder %s106, %s108
      %p115 = scmp.eq.s32.totalorder %s30, 1
      %p116 = por %p114, %p115
      %p117 = scmp.ne.s32.totalorder %s108, %s109
      %p118 = scmp.eq.s32.totalorder %s30, 0
      %p119 = por %p117, %p118
      %p120 = scmp.ne.s32.totalorder %s108, %s109
      %p121 = scmp.eq.s32.totalorder %s31, 1
      %p122 = por %p120, %p121
      %p124 = scmp.ne.s32.totalorder %s109, %s123
      %p125 = scmp.eq.s32.totalorder %s31, 0
      %p126 = por %p124, %p125
      %s128 = sadd.s32 %s127, 1
      %p131 = scmp.eq.s32.totalorder %s25, 1
      %p132 = scmp.ne.s32.totalorder %s127, %s129
      %p133 = scmp.eq.s32.totalorder %s25, 0
      %p134 = por %p132, %p133
      %p135 = scmp.ne.s32.totalorder %s127, %s129
      %p136 = scmp.eq.s32.totalorder %s30, 1
      %p137 = por %p135, %p136
      %p138 = scmp.ne.s32.totalorder %s129, %s130
      %p139 = scmp.eq.s32.totalorder %s30, 0
      %p140 = por %p138, %p139
      %p141 = scmp.ne.s32.totalorder %s129, %s130
      %p142 = scmp.eq.s32.totalorder %s31, 1
      %p143 = por %p141, %p142
      %p145 = scmp.ne.s32.totalorder %s130, %s144
      %p146 = scmp.eq.s32.totalorder %s31, 0
      %p147 = por %p145, %p146
      %s148 = ssub.s32 %s25, %s32
      %p149 = scmp.eq.s32.totalorder %s148, 0
      %s151 = sadd.s32 %s150, 1
      %s152 = scalar_select %p149, %s150, %s151
      %p155 = pneg %p149
      %p156 = scmp.eq.s32.totalorder %s25, 1
      %p157 = por %p155, %p156
      %p158 = scmp.ne.s32.totalorder %s150, %s153
      %p159 = scmp.eq.s32.totalorder %s25, 0
      %p160 = por %p158, %p159
      %p161 = scmp.ne.s32.totalorder %s150, %s153
      %p162 = scmp.eq.s32.totalorder %s30, 1
      %p163 = por %p161, %p162
      %p164 = scmp.ne.s32.totalorder %s153, %s154
      %p165 = scmp.eq.s32.totalorder %s30, 0
      %p166 = por %p164, %p165
      %p167 = scmp.ne.s32.totalorder %s153, %s154
      %p168 = scmp.eq.s32.totalorder %s31, 1
      %p169 = por %p167, %p168
      %p171 = scmp.ne.s32.totalorder %s154, %s170
      %p172 = scmp.eq.s32.totalorder %s31, 0
      %p173 = por %p171, %p172
      %s174 = ssub.s32 %s25, %s32
      %p175 = scmp.eq.s32.totalorder %s174, 0
      %s177 = sadd.s32 %s176, 1
      %s178 = scalar_select %p175, %s176, %s177
      %p181 = pneg %p175
      %p182 = scmp.eq.s32.totalorder %s25, 1
      %p183 = por %p181, %p182
      %p184 = scmp.ne.s32.totalorder %s176, %s179
      %p185 = scmp.eq.s32.totalorder %s25, 0
      %p186 = por %p184, %p185
      %p187 = scmp.ne.s32.totalorder %s176, %s179
      %p188 = scmp.eq.s32.totalorder %s30, 1
      %p189 = por %p187, %p188
      %p190 = scmp.ne.s32.totalorder %s179, %s180
      %p191 = scmp.eq.s32.totalorder %s30, 0
      %p192 = por %p190, %p191
      %p193 = scmp.ne.s32.totalorder %s179, %s180
      %p194 = scmp.eq.s32.totalorder %s31, 1
      %p195 = por %p193, %p194
      %p197 = scmp.ne.s32.totalorder %s180, %s196
      %p198 = scmp.eq.s32.totalorder %s31, 0
      %p199 = por %p197, %p198
      %p200 = scmp.le.s32.totalorder 1, %s25
      %p201 = scmp.lt.s32.totalorder %s25, 3
      %p202 = pnand %p200, %p201
      %p203 = pneg %p202
      // Predicated region
      $region9: #{tpu_custom_call.1} parent=5 // pred_check
        _
      $region10: #{tpu_custom_call.1} parent=5 // pred_check_branch
        %205 = sbr.rel (%p202) target = $region12
      $region11: #{tpu_custom_call.1} parent=5 // pred_region
        %s206 = ssub.s32 %s25, 1
        // Predicated region
        $region13: #{tpu_custom_call.1} parent=11 // pred_check
          %p207 = pneg %p98
        $region14: #{tpu_custom_call.1} parent=11 // pred_check_branch
          %209 = sbr.rel (%p207) target = $region16
        $region15: #{tpu_custom_call.1} parent=11 // pred_region
          %211 = vsyncadd [#allocation6], 0
          %s212 = sshll.u32 %s2, 4
          %s213 = int_to_ptr.hbm [resolvable:$true] %s212
          %s214 = sshll.u32 [#allocation7], 4
          %s215 = int_to_ptr.vmem [resolvable:$true] %s214
          %220 = dma.hbm_to_vmem [thread:$0]  %s213, 256, %s215, [#allocation6], 128, 128, 8
        $region16: #{tpu_custom_call.1} parent=11 // pred_fallthru
          _
        // Predicated region
        $region17: #{tpu_custom_call.1} parent=11 // pred_check
          %p221 = pneg %p119
        $region18: #{tpu_custom_call.1} parent=11 // pred_check_branch
          %223 = sbr.rel (%p221) target = $region20
        $region19: #{tpu_custom_call.1} parent=11 // pred_region
          _
        $region20: #{tpu_custom_call.1} parent=11 // pred_fallthru
          _
        // Predicated region
        $region21: #{tpu_custom_call.1} parent=11 // pred_check
          %p224 = pneg %p140
        $region22: #{tpu_custom_call.1} parent=11 // pred_check_branch
          %226 = sbr.rel (%p224) target = $region24
        $region23: #{tpu_custom_call.1} parent=11 // pred_region
          _
        $region24: #{tpu_custom_call.1} parent=11 // pred_fallthru
          _
      $region12: #{tpu_custom_call.1} parent=5 // pred_fallthru
        _
      %p227 = scmp.lt.s32.totalorder %s25, 2
      // Predicated region
      $region25: #{tpu_custom_call.1} parent=5 // pred_check
        %p228 = pneg %p227
      $region26: #{tpu_custom_call.1} parent=5 // pred_check_branch
        %230 = sbr.rel (%p228) target = $region28
      $region27: #{tpu_custom_call.1} parent=5 // pred_region
        // Predicated region
        $region29: #{tpu_custom_call.1} parent=27 // pred_check
          %p231 = pneg %p45
        $region30: #{tpu_custom_call.1} parent=27 // pred_check_branch
          %233 = sbr.rel (%p231) target = $region32
        $region31: #{tpu_custom_call.1} parent=27 // pred_region
          %s234 = sand.u32 %s35, 1
          %s235 = scalar_lea.sflag [#allocation3], %s234
          %s236 = sand.u32 %s35, 1
          %s237 = smul.addr %s236, 16
          %s238 = scalar_lea.vmem [#allocation2], %s237
          %240 = vsyncadd %s235, 0
          %s241 = smul.addr %s25, 2
          %s242 = smul.addr %s241, 8
          %s243 = scalar_lea.hbm %s0, %s242
          %s244 = sshll.u32 %s243, 4
          %s245 = int_to_ptr.hbm [resolvable:$true] %s244
          %s246 = sshll.u32 %s238, 4
          %s247 = int_to_ptr.vmem [resolvable:$true] %s246
          %252 = dma.hbm_to_vmem [thread:$0]  %s245, 256, %s247, %s235, 128, 128, 8
        $region32: #{tpu_custom_call.1} parent=27 // pred_fallthru
          _
        // Predicated region
        $region33: #{tpu_custom_call.1} parent=27 // pred_check
          %p253 = pneg %p71
        $region34: #{tpu_custom_call.1} parent=27 // pred_check_branch
          %255 = sbr.rel (%p253) target = $region36
        $region35: #{tpu_custom_call.1} parent=27 // pred_region
          %s256 = sand.u32 %s25, 1
          %s257 = scalar_lea.sflag [#allocation6], %s256
          %s258 = sand.u32 %s61, 1
          %s259 = smul.addr %s258, 16
          %s260 = scalar_lea.vmem [#allocation5], %s259
          %262 = vsyncadd %s257, 0
          %s263 = smul.addr %s25, 2
          %s264 = smul.addr %s263, 8
          %s265 = scalar_lea.hbm %s1, %s264
          %s266 = sshll.u32 %s265, 4
          %s267 = int_to_ptr.hbm [resolvable:$true] %s266
          %s268 = sshll.u32 %s260, 4
          %s269 = int_to_ptr.vmem [resolvable:$true] %s268
          %274 = dma.hbm_to_vmem [thread:$0]  %s267, 256, %s269, %s257, 128, 128, 8
        $region36: #{tpu_custom_call.1} parent=27 // pred_fallthru
          _
      $region28: #{tpu_custom_call.1} parent=5 // pred_fallthru
        _
      %p275 = scmp.le.s32.totalorder 1, %s25
      %p276 = scmp.lt.s32.totalorder %s25, 3
      %p277 = pnand %p275, %p276
      %p278 = pneg %p277
      // Predicated region
      $region37: #{tpu_custom_call.1} parent=5 // pred_check
        _
      $region38: #{tpu_custom_call.1} parent=5 // pred_check_branch
        %280 = sbr.rel (%p277) target = $region40
      $region39: #{tpu_custom_call.1} parent=5 // pred_region
        %s281 = ssub.s32 %s25, 1
        %s282 = sand.u32 %s38, 1
        %s283 = scalar_lea.sflag [#allocation3], %s282
        %s284 = sand.u32 %s38, 1
        %s285 = smul.addr %s284, 16
        %s286 = scalar_lea.vmem [#allocation2], %s285
        // Predicated region
        $region41: #{tpu_custom_call.1} parent=39 // pred_check
          %p287 = pneg %p51
        $region42: #{tpu_custom_call.1} parent=39 // pred_check_branch
          %289 = sbr.rel (%p287) target = $region44
        $region43: #{tpu_custom_call.1} parent=39 // pred_region
          %291 = dma.done %s283, 256
        $region44: #{tpu_custom_call.1} parent=39 // pred_fallthru
          _
        %s292 = sand.u32 %s30, 1
        %s293 = scalar_lea.sflag [#allocation6], %s292
        %s294 = sand.u32 %s64, 1
        %s295 = smul.addr %s294, 16
        %s296 = scalar_lea.vmem [#allocation5], %s295
        // Predicated region
        $region45: #{tpu_custom_call.1} parent=39 // pred_check
          %p297 = pneg %p77
        $region46: #{tpu_custom_call.1} parent=39 // pred_check_branch
          %299 = sbr.rel (%p297) target = $region48
        $region47: #{tpu_custom_call.1} parent=39 // pred_region
          %301 = dma.done %s293, 256
        $region48: #{tpu_custom_call.1} parent=39 // pred_fallthru
          _
        // Predicated region
        $region49: #{tpu_custom_call.1} parent=39 // pred_check
          %p302 = pneg %p98
        $region50: #{tpu_custom_call.1} parent=39 // pred_check_branch
          %304 = sbr.rel (%p302) target = $region52
        $region51: #{tpu_custom_call.1} parent=39 // pred_region
          %306 = dma.done [#allocation6], 256
        $region52: #{tpu_custom_call.1} parent=39 // pred_fallthru
          _
        %s307 = sand.u32 %s38, 1
        %s308 = scalar_lea.sflag [#allocation3], %s307
        %s309 = sand.u32 %s38, 1
        %s310 = smul.addr %s309, 16
        %s311 = scalar_lea.vmem [#allocation2], %s310
        %p312 = pneg %p51
        %p313 = pneg %p48
        %s314 = sand.u32 %s30, 1
        %s315 = scalar_lea.sflag [#allocation6], %s314
        %s316 = sand.u32 %s64, 1
        %s317 = smul.addr %s316, 16
        %s318 = scalar_lea.vmem [#allocation5], %s317
        %p319 = pneg %p77
        %p320 = pneg %p74
        %p321 = pneg %p98
        %p322 = pneg %p95
        %p323 = pneg %p119
        %p324 = pneg %p116
        %p325 = pneg %p140
        %p326 = pneg %p137
        %p327 = pneg %p166
        %p328 = pneg %p163
        %s329 = sand.u32 %s153, 1
        %s330 = scalar_lea.sflag [#allocation4], %s329
        %s331 = sand.u32 %s153, 1
        %s332 = scalar_lea.vmem [#allocation8], %s331
        %p333 = pneg %p192
        %p334 = pneg %p189
        %s335 = sand.u32 %s179, 1
        %s336 = scalar_lea.sflag [#allocation10], %s335
        %s337 = sand.u32 %s179, 1
        %s338 = scalar_lea.vmem [#allocation9], %s337
        %v339 = vld [vmem:[%s286] sm:$0xff]
        %v340 = vld [vmem:[%s286 + $0x8] sm:$0xff]
        %v341 = vld [vmem:[%s296] sm:$0xff]
        %v342 = vld [vmem:[%s296 + $0x8] sm:$0xff]
        %v343 = vld [vmem:[#allocation7] sm:$0xff]
        %v344 = vld [vmem:[#allocation7 + $0x8] sm:$0xff]
        %v345 = vld [vmem:[%s3] sm:$0xff]
        %v346 = vld [vmem:[%s3 + $0x8] sm:$0xff]
        %v347 = vld [vmem:[%s3 + $0x10] sm:$0xff]
        %v348 = vld [vmem:[%s3 + $0x18] sm:$0xff]
        %v349 = vld [vmem:[%s3 + $0x20] sm:$0xff]
        %v350 = vld [vmem:[%s3 + $0x28] sm:$0xff]
        %v351 = vld [vmem:[%s4] sm:$0xff]
        %v352 = vld [vmem:[%s4 + $0x8] sm:$0xff]
        %v353 = vld [vmem:[%s4 + $0x10] sm:$0xff]
        %v354 = vld [vmem:[%s4 + $0x18] sm:$0xff]
        %v355 = vld [vmem:[%s4 + $0x20] sm:$0xff]
        %v356 = vld [vmem:[%s4 + $0x28] sm:$0xff]
        %vm357 = vcmask 130048
        %v359 = vsel %vm357, %v343, 0
        %v362 = vsel %vm357, %v344, 0
        %364 = vmatpush.msra.mxu0 0.0
        %365 = vmatpush.msra.mxu0 0.0
        %366 = vmatpush.msra.mxu0 0.0
        %367 = vmatpush.msra.mxu0 0.0
        %368 = vmatpush.msra.mxu0 0.0
        %369 = vmatpush.msra.mxu0 0.0
        %370 = vmatpush.msra.mxu0 0.0
        %371 = vmatpush.msra.mxu0 0.0
        %372 = vmatpush.msra.mxu0 0.0
        %373 = vmatpush.msra.mxu0 0.0
        %374 = vmatpush.msra.mxu0 0.0
        %375 = vmatpush.msra.mxu0 0.0
        %376 = vmatpush.msra.mxu0 0.0
        %377 = vmatpush.msra.mxu0 0.0
        %378 = vmatpush.msra.mxu0 %v340
        %379 = vmatpush.msra.mxu0 %v339
        %380 = vmatmul.f32.gmra.mxu0 %v359
        %v381 = vpop.f32.mrf.mxu0
        %v382 = vadd.f32 0.0, %v381
        %383 = vmatmul.f32.gmra.mxu0 %v362
        %v384 = vpop.f32.mrf.mxu0
        %v385 = vadd.f32 0.0, %v384
        %386 = vdwg.mxu0
        %vm387 = vcmask 392192
        %v389 = vsel %vm387, %v382, 0
        %v392 = vsel %vm387, %v385, 0
        %394 = vmatpush.msra.mxu0 0.0
        %395 = vmatpush.msra.mxu0 0.0
        %396 = vmatpush.msra.mxu0 0.0
        %397 = vmatpush.msra.mxu0 0.0
        %398 = vmatpush.msra.mxu0 0.0
        %399 = vmatpush.msra.mxu0 0.0
        %400 = vmatpush.msra.mxu0 0.0
        %401 = vmatpush.msra.mxu0 0.0
        %402 = vmatpush.msra.mxu0 0.0
        %403 = vmatpush.msra.mxu0 0.0
        %404 = vmatpush.msra.mxu0 %v350
        %405 = vmatpush.msra.mxu0 %v349
        %406 = vmatpush.msra.mxu0 %v348
        %407 = vmatpush.msra.mxu0 %v347
        %408 = vmatpush.msra.mxu0 %v346
        %409 = vmatpush.msra.mxu0 %v345
        %410 = vmatmul.f32.gmra.mxu0 %v389
        %v411 = vpop.f32.mrf.mxu0
        %v412 = vadd.f32 0.0, %v411
        %413 = vmatmul.f32.gmra.mxu0 %v392
        %v414 = vpop.f32.mrf.mxu0
        %v415 = vadd.f32 0.0, %v414
        %416 = vdwg.mxu0
        %417 = vmatpush.msra.mxu0 0.0
        %418 = vmatpush.msra.mxu0 0.0
        %419 = vmatpush.msra.mxu0 0.0
        %420 = vmatpush.msra.mxu0 0.0
        %421 = vmatpush.msra.mxu0 0.0
        %422 = vmatpush.msra.mxu0 0.0
        %423 = vmatpush.msra.mxu0 0.0
        %424 = vmatpush.msra.mxu0 0.0
        %425 = vmatpush.msra.mxu0 0.0
        %426 = vmatpush.msra.mxu0 0.0
        %427 = vmatpush.msra.mxu0 0.0
        %428 = vmatpush.msra.mxu0 0.0
        %429 = vmatpush.msra.mxu0 0.0
        %430 = vmatpush.msra.mxu0 0.0
        %431 = vmatpush.msra.mxu0 %v342
        %432 = vmatpush.msra.mxu0 %v341
        %433 = vmatmul.f32.gmra.mxu0 %v359
        %v434 = vpop.f32.mrf.mxu0
        %v435 = vadd.f32 0.0, %v434
        %436 = vmatmul.f32.gmra.mxu0 %v362
        %v437 = vpop.f32.mrf.mxu0
        %v438 = vadd.f32 0.0, %v437
        %439 = vdwg.mxu0
        %v441 = vsel %vm387, %v435, 0
        %v444 = vsel %vm387, %v438, 0
        %446 = vmatpush.msra.mxu0 0.0
        %447 = vmatpush.msra.mxu0 0.0
        %448 = vmatpush.msra.mxu0 0.0
        %449 = vmatpush.msra.mxu0 0.0
        %450 = vmatpush.msra.mxu0 0.0
        %451 = vmatpush.msra.mxu0 0.0
        %452 = vmatpush.msra.mxu0 0.0
        %453 = vmatpush.msra.mxu0 0.0
        %454 = vmatpush.msra.mxu0 0.0
        %455 = vmatpush.msra.mxu0 0.0
        %456 = vmatpush.msra.mxu0 %v350
        %457 = vmatpush.msra.mxu0 %v349
        %458 = vmatpush.msra.mxu0 %v348
        %459 = vmatpush.msra.mxu0 %v347
        %460 = vmatpush.msra.mxu0 %v346
        %461 = vmatpush.msra.mxu0 %v345
        %462 = vmatmul.f32.gmra.mxu0 %v441
        %v463 = vpop.f32.mrf.mxu0
        %v464 = vadd.f32 0.0, %v463
        %465 = vmatmul.f32.gmra.mxu0 %v444
        %v466 = vpop.f32.mrf.mxu0
        %v467 = vadd.f32 0.0, %v466
        %468 = vdwg.mxu0
        %v469 = vmul.f32 %v412, %v412
        %v470 = vmul.f32 %v415, %v415
        %v471 = vmul.f32 %v464, %v464
        %v472 = vmul.f32 %v467, %v467
        %v473 = vmul.f32 %v412, %v464
        %v474 = vmul.f32 %v415, %v467
        %v475 = vmul.f32 %v339, %v339
        %v476 = vmul.f32 %v340, %v340
        %477 = vmatpush.msra.mxu0 0.0
        %478 = vmatpush.msra.mxu0 0.0
        %479 = vmatpush.msra.mxu0 0.0
        %480 = vmatpush.msra.mxu0 0.0
        %481 = vmatpush.msra.mxu0 0.0
        %482 = vmatpush.msra.mxu0 0.0
        %483 = vmatpush.msra.mxu0 0.0
        %484 = vmatpush.msra.mxu0 0.0
        %485 = vmatpush.msra.mxu0 0.0
        %486 = vmatpush.msra.mxu0 0.0
        %487 = vmatpush.msra.mxu0 0.0
        %488 = vmatpush.msra.mxu0 0.0
        %489 = vmatpush.msra.mxu0 0.0
        %490 = vmatpush.msra.mxu0 0.0
        %491 = vmatpush.msra.mxu0 %v476
        %492 = vmatpush.msra.mxu0 %v475
        %493 = vmatmul.f32.gmra.mxu0 %v359
        %v494 = vpop.f32.mrf.mxu0
        %v495 = vadd.f32 0.0, %v494
        %496 = vmatmul.f32.gmra.mxu0 %v362
        %v497 = vpop.f32.mrf.mxu0
        %v498 = vadd.f32 0.0, %v497
        %499 = vdwg.mxu0
        %v501 = vsel %vm387, %v495, 0
        %v504 = vsel %vm387, %v498, 0
        %506 = vmatpush.msra.mxu0 0.0
        %507 = vmatpush.msra.mxu0 0.0
        %508 = vmatpush.msra.mxu0 0.0
        %509 = vmatpush.msra.mxu0 0.0
        %510 = vmatpush.msra.mxu0 0.0
        %511 = vmatpush.msra.mxu0 0.0
        %512 = vmatpush.msra.mxu0 0.0
        %513 = vmatpush.msra.mxu0 0.0
        %514 = vmatpush.msra.mxu0 0.0
        %515 = vmatpush.msra.mxu0 0.0
        %516 = vmatpush.msra.mxu0 %v350
        %517 = vmatpush.msra.mxu0 %v349
        %518 = vmatpush.msra.mxu0 %v348
        %519 = vmatpush.msra.mxu0 %v347
        %520 = vmatpush.msra.mxu0 %v346
        %521 = vmatpush.msra.mxu0 %v345
        %522 = vmatmul.f32.gmra.mxu0 %v501
        %v523 = vpop.f32.mrf.mxu0
        %v524 = vadd.f32 0.0, %v523
        %525 = vmatmul.f32.gmra.mxu0 %v504
        %v526 = vpop.f32.mrf.mxu0
        %v527 = vadd.f32 0.0, %v526
        %528 = vdwg.mxu0
        %v529 = vsub.f32 %v524, %v469
        %v530 = vsub.f32 %v527, %v470
        %v531 = vmul.f32 %v341, %v341
        %v532 = vmul.f32 %v342, %v342
        %533 = vmatpush.msra.mxu0 0.0
        %534 = vmatpush.msra.mxu0 0.0
        %535 = vmatpush.msra.mxu0 0.0
        %536 = vmatpush.msra.mxu0 0.0
        %537 = vmatpush.msra.mxu0 0.0
        %538 = vmatpush.msra.mxu0 0.0
        %539 = vmatpush.msra.mxu0 0.0
        %540 = vmatpush.msra.mxu0 0.0
        %541 = vmatpush.msra.mxu0 0.0
        %542 = vmatpush.msra.mxu0 0.0
        %543 = vmatpush.msra.mxu0 0.0
        %544 = vmatpush.msra.mxu0 0.0
        %545 = vmatpush.msra.mxu0 0.0
        %546 = vmatpush.msra.mxu0 0.0
        %547 = vmatpush.msra.mxu0 %v532
        %548 = vmatpush.msra.mxu0 %v531
        %549 = vmatmul.f32.gmra.mxu0 %v359
        %v550 = vpop.f32.mrf.mxu0
        %v551 = vadd.f32 0.0, %v550
        %552 = vmatmul.f32.gmra.mxu0 %v362
        %v553 = vpop.f32.mrf.mxu0
        %v554 = vadd.f32 0.0, %v553
        %555 = vdwg.mxu0
        %v557 = vsel %vm387, %v551, 0
        %v560 = vsel %vm387, %v554, 0
        %562 = vmatpush.msra.mxu0 0.0
        %563 = vmatpush.msra.mxu0 0.0
        %564 = vmatpush.msra.mxu0 0.0
        %565 = vmatpush.msra.mxu0 0.0
        %566 = vmatpush.msra.mxu0 0.0
        %567 = vmatpush.msra.mxu0 0.0
        %568 = vmatpush.msra.mxu0 0.0
        %569 = vmatpush.msra.mxu0 0.0
        %570 = vmatpush.msra.mxu0 0.0
        %571 = vmatpush.msra.mxu0 0.0
        %572 = vmatpush.msra.mxu0 %v350
        %573 = vmatpush.msra.mxu0 %v349
        %574 = vmatpush.msra.mxu0 %v348
        %575 = vmatpush.msra.mxu0 %v347
        %576 = vmatpush.msra.mxu0 %v346
        %577 = vmatpush.msra.mxu0 %v345
        %578 = vmatmul.f32.gmra.mxu0 %v557
        %v579 = vpop.f32.mrf.mxu0
        %v580 = vadd.f32 0.0, %v579
        %581 = vmatmul.f32.gmra.mxu0 %v560
        %v582 = vpop.f32.mrf.mxu0
        %v583 = vadd.f32 0.0, %v582
        %584 = vdwg.mxu0
        %v585 = vsub.f32 %v580, %v471
        %v586 = vsub.f32 %v583, %v472
        %v587 = vmul.f32 %v339, %v341
        %v588 = vmul.f32 %v340, %v342
        %589 = vmatpush.msra.mxu0 0.0
        %590 = vmatpush.msra.mxu0 0.0
        %591 = vmatpush.msra.mxu0 0.0
        %592 = vmatpush.msra.mxu0 0.0
        %593 = vmatpush.msra.mxu0 0.0
        %594 = vmatpush.msra.mxu0 0.0
        %595 = vmatpush.msra.mxu0 0.0
        %596 = vmatpush.msra.mxu0 0.0
        %597 = vmatpush.msra.mxu0 0.0
        %598 = vmatpush.msra.mxu0 0.0
        %599 = vmatpush.msra.mxu0 0.0
        %600 = vmatpush.msra.mxu0 0.0
        %601 = vmatpush.msra.mxu0 0.0
        %602 = vmatpush.msra.mxu0 0.0
        %603 = vmatpush.msra.mxu0 %v588
        %604 = vmatpush.msra.mxu0 %v587
        %605 = vmatmul.f32.gmra.mxu0 %v359
        %v606 = vpop.f32.mrf.mxu0
        %v607 = vadd.f32 0.0, %v606
        %608 = vmatmul.f32.gmra.mxu0 %v362
        %v609 = vpop.f32.mrf.mxu0
        %v610 = vadd.f32 0.0, %v609
        %611 = vdwg.mxu0
        %v613 = vsel %vm387, %v607, 0
        %v616 = vsel %vm387, %v610, 0
        %618 = vmatpush.msra.mxu0 0.0
        %619 = vmatpush.msra.mxu0 0.0
        %620 = vmatpush.msra.mxu0 0.0
        %621 = vmatpush.msra.mxu0 0.0
        %622 = vmatpush.msra.mxu0 0.0
        %623 = vmatpush.msra.mxu0 0.0
        %624 = vmatpush.msra.mxu0 0.0
        %625 = vmatpush.msra.mxu0 0.0
        %626 = vmatpush.msra.mxu0 0.0
        %627 = vmatpush.msra.mxu0 0.0
        %628 = vmatpush.msra.mxu0 %v350
        %629 = vmatpush.msra.mxu0 %v349
        %630 = vmatpush.msra.mxu0 %v348
        %631 = vmatpush.msra.mxu0 %v347
        %632 = vmatpush.msra.mxu0 %v346
        %633 = vmatpush.msra.mxu0 %v345
        %634 = vmatmul.f32.gmra.mxu0 %v613
        %v635 = vpop.f32.mrf.mxu0
        %v636 = vadd.f32 0.0, %v635
        %637 = vmatmul.f32.gmra.mxu0 %v616
        %v638 = vpop.f32.mrf.mxu0
        %v639 = vadd.f32 0.0, %v638
        %640 = vdwg.mxu0
        %v641 = vsub.f32 %v636, %v473
        %v642 = vsub.f32 %v639, %v474
        %v643 = vmul.f32 %v473, 2.0
        %v644 = vmul.f32 %v474, 2.0
        %v645 = vadd.f32 %v643, 0.0001
        %v646 = vadd.f32 %v644, 0.0001
        %v647 = vmul.f32 %v641, 2.0
        %v648 = vmul.f32 %v642, 2.0
        %v649 = vadd.f32 %v647, 0.0009
        %v650 = vadd.f32 %v648, 0.0009
        %v651 = vmul.f32 %v645, %v649
        %v652 = vmul.f32 %v646, %v650
        %v653 = vadd.f32 %v469, %v471
        %v654 = vadd.f32 %v470, %v472
        %v655 = vadd.f32 %v653, 0.0001
        %v656 = vadd.f32 %v654, 0.0001
        %v657 = vadd.f32 %v529, %v585
        %v658 = vadd.f32 %v530, %v586
        %v659 = vadd.f32 %v657, 0.0009
        %v660 = vadd.f32 %v658, 0.0009
        %v661 = vmul.f32 %v655, %v659
        %v662 = vmul.f32 %v656, %v660
        %v663 = vrcp.pop %v661
        %v664 = vmul.f32 %v661, %v663
        %v665 = vsub.f32 1.0, %v664
        %v666 = vmul.f32 %v663, %v665
        %v667 = vadd.f32 %v663, %v666
        %vm668 = vweird.f32 %v661
        %vm669 = vweird.f32 %v663
        %vm670 = vmor %vm668, %vm669
        %v671 = vsel %vm670, %v663, %v667
        %v672 = vand.u32 2147483647, %v661
        %vm673 = vcmp.eq.f32.partialorder %v672, 8.507059e+37
        %v674 = vand.u32 %v661, 2147483648
        %v675 = vor.u32 1.1754944e-38, %v674
        %v676 = vsel %vm673, %v675, %v671
        %v677 = vmul.f32 %v651, %v676
        %v678 = vrcp.pop %v662
        %v679 = vmul.f32 %v662, %v678
        %v680 = vsub.f32 1.0, %v679
        %v681 = vmul.f32 %v678, %v680
        %v682 = vadd.f32 %v678, %v681
        %vm683 = vweird.f32 %v662
        %vm684 = vweird.f32 %v678
        %vm685 = vmor %vm683, %vm684
        %v686 = vsel %vm685, %v678, %v682
        %v687 = vand.u32 2147483647, %v662
        %vm688 = vcmp.eq.f32.partialorder %v687, 8.507059e+37
        %v689 = vand.u32 %v662, 2147483648
        %v690 = vor.u32 1.1754944e-38, %v689
        %v691 = vsel %vm688, %v690, %v686
        %v692 = vmul.f32 %v652, %v691
        %v693 = vsel %vm387, %v677, 0.0
        %v694 = vsel %vm387, %v692, 0.0
        %v695 = vadd.f32 %v693, %v694
        %v696 = vrot.slane %v695, 4
        %v697 = vadd.f32 %v695, %v696
        %v698 = vrot.slane %v697, 2
        %v699 = vadd.f32 %v697, %v698
        %v700 = vrot.slane %v699, 1
        %v701 = vadd.f32 %v699, %v700
        %v703 = vsel %vm387, %v701, 0
        %705 = vmatpush.msra.mxu0 0.0
        %706 = vmatpush.msra.mxu0 0.0
        %707 = vmatpush.msra.mxu0 0.0
        %708 = vmatpush.msra.mxu0 0.0
        %709 = vmatpush.msra.mxu0 0.0
        %710 = vmatpush.msra.mxu0 0.0
        %711 = vmatpush.msra.mxu0 0.0
        %712 = vmatpush.msra.mxu0 0.0
        %713 = vmatpush.msra.mxu0 0.0
        %714 = vmatpush.msra.mxu0 0.0
        %715 = vmatpush.msra.mxu0 %v356
        %716 = vmatpush.msra.mxu0 %v355
        %717 = vmatpush.msra.mxu0 %v354
        %718 = vmatpush.msra.mxu0 %v353
        %719 = vmatpush.msra.mxu0 %v352
        %720 = vmatpush.msra.mxu0 %v351
        %721 = vmatmul.f32.gmra.mxu0 %v703
        %v722 = vpop.f32.mrf.mxu0
        %v723 = vadd.f32 0.0, %v722
        %724 = vdwg.mxu0
        %vm725 = vcmask 16384
        %726 = vst.msk [vmem:[%s332] sm:$0x1] %vm725, %v723
        %v727 = vsub.f32 %v339, %v341
        %v728 = vsub.f32 %v340, %v342
        %v729 = vmul.f32 %v727, %v727
        %v730 = vmul.f32 %v728, %v728
        %v731 = vsel %vm387, %v729, 0.0
        %v732 = vsel %vm387, %v730, 0.0
        %v733 = vadd.f32 %v731, %v732
        %v734 = vrot.slane %v733, 4
        %v735 = vadd.f32 %v733, %v734
        %v736 = vrot.slane %v735, 2
        %v737 = vadd.f32 %v735, %v736
        %v738 = vrot.slane %v737, 1
        %v739 = vadd.f32 %v737, %v738
        %v741 = vsel %vm387, %v739, 0
        %743 = vmatpush.msra.mxu0 0.0
        %744 = vmatpush.msra.mxu0 0.0
        %745 = vmatpush.msra.mxu0 0.0
        %746 = vmatpush.msra.mxu0 0.0
        %747 = vmatpush.msra.mxu0 0.0
        %748 = vmatpush.msra.mxu0 0.0
        %749 = vmatpush.msra.mxu0 0.0
        %750 = vmatpush.msra.mxu0 0.0
        %751 = vmatpush.msra.mxu0 0.0
        %752 = vmatpush.msra.mxu0 0.0
        %753 = vmatpush.msra.mxu0 %v356
        %754 = vmatpush.msra.mxu0 %v355
        %755 = vmatpush.msra.mxu0 %v354
        %756 = vmatpush.msra.mxu0 %v353
        %757 = vmatpush.msra.mxu0 %v352
        %758 = vmatpush.msra.mxu0 %v351
        %759 = vmatmul.f32.gmra.mxu0 %v741
        %v760 = vpop.f32.mrf.mxu0
        %v761 = vadd.f32 0.0, %v760
        %762 = vdwg.mxu0
        %763 = vst.msk [vmem:[%s338] sm:$0x1] %vm725, %v761
        %s764 = sand.u32 %s153, 1
        %s765 = scalar_lea.sflag [#allocation4], %s764
        %s766 = sand.u32 %s153, 1
        %s767 = scalar_lea.vmem [#allocation8], %s766
        %s768 = sand.u32 %s179, 1
        %s769 = scalar_lea.sflag [#allocation10], %s768
        %s770 = sand.u32 %s179, 1
        %s771 = scalar_lea.vmem [#allocation9], %s770
        // Predicated region
        $region53: #{tpu_custom_call.1} parent=39 // pred_check
          %p772 = pneg %p163
        $region54: #{tpu_custom_call.1} parent=39 // pred_check_branch
          %774 = sbr.rel (%p772) target = $region56
        $region55: #{tpu_custom_call.1} parent=39 // pred_region
          %776 = vsyncadd %s765, 0
          %s777 = scalar_lea.hbm %s5, %s30
          %s779 = sshll.u32 %s767, 4
          %s780 = int_to_ptr.vmem [resolvable:$true] %s779
          %s781 = sshll.u32 %s777, 4
          %s782 = int_to_ptr.hbm [resolvable:$true] %s781
          %784 = dma.vmem_to_hbm [thread:$0]  %s780, 16, %s782, %s765
        $region56: #{tpu_custom_call.1} parent=39 // pred_fallthru
          _
        // Predicated region
        $region57: #{tpu_custom_call.1} parent=39 // pred_check
          %p785 = pneg %p189
        $region58: #{tpu_custom_call.1} parent=39 // pred_check_branch
          %787 = sbr.rel (%p785) target = $region60
        $region59: #{tpu_custom_call.1} parent=39 // pred_region
          %789 = vsyncadd %s769, 0
          %s790 = scalar_lea.hbm %s6, %s30
          %s792 = sshll.u32 %s771, 4
          %s793 = int_to_ptr.vmem [resolvable:$true] %s792
          %s794 = sshll.u32 %s790, 4
          %s795 = int_to_ptr.hbm [resolvable:$true] %s794
          %797 = dma.vmem_to_hbm [thread:$0]  %s793, 16, %s795, %s769
        $region60: #{tpu_custom_call.1} parent=39 // pred_fallthru
          _
      $region40: #{tpu_custom_call.1} parent=5 // pred_fallthru
        _
      %p798 = scmp.le.s32.totalorder 2, %s25
      // Predicated region
      $region61: #{tpu_custom_call.1} parent=5 // pred_check
        %p799 = pneg %p798
      $region62: #{tpu_custom_call.1} parent=5 // pred_check_branch
        %801 = sbr.rel (%p799) target = $region64
      $region63: #{tpu_custom_call.1} parent=5 // pred_region
        %s802 = ssub.s32 %s25, 2
        // Predicated region
        $region65: #{tpu_custom_call.1} parent=63 // pred_check
          %p803 = pneg %p169
        $region66: #{tpu_custom_call.1} parent=63 // pred_check_branch
          %805 = sbr.rel (%p803) target = $region68
        $region67: #{tpu_custom_call.1} parent=63 // pred_region
          %s806 = sand.u32 %s154, 1
          %s807 = scalar_lea.sflag [#allocation4], %s806
          %s808 = sand.u32 %s154, 1
          %s809 = scalar_lea.vmem [#allocation8], %s808
          %811 = dma.done %s807, 16
        $region68: #{tpu_custom_call.1} parent=63 // pred_fallthru
          _
        // Predicated region
        $region69: #{tpu_custom_call.1} parent=63 // pred_check
          %p812 = pneg %p195
        $region70: #{tpu_custom_call.1} parent=63 // pred_check_branch
          %814 = sbr.rel (%p812) target = $region72
        $region71: #{tpu_custom_call.1} parent=63 // pred_region
          %s815 = sand.u32 %s180, 1
          %s816 = scalar_lea.sflag [#allocation10], %s815
          %s817 = sand.u32 %s180, 1
          %s818 = scalar_lea.vmem [#allocation9], %s817
          %820 = dma.done %s816, 16
        $region72: #{tpu_custom_call.1} parent=63 // pred_fallthru
          _
      $region64: #{tpu_custom_call.1} parent=5 // pred_fallthru
        _
    $region6: #{tpu_custom_call.1} parent=1 // loop_footer
      %s29 = sadd.s32 1, %s25
    $region7: #{tpu_custom_call.1} parent=1 // loop_footer_branch
      %24 = sbr.rel target = $region3
    $region8: #{tpu_custom_call.1} parent=1 // loop_exit
      _
    %821 = vsyncpa [#allocation3], 1
    %s822 = scalar_lea.sflag [#allocation3], 1
    %823 = vsyncpa %s822, 1
    %824 = vsyncpa [#allocation6], 1
    %s825 = scalar_lea.sflag [#allocation6], 1
    %826 = vsyncpa %s825, 1
    %827 = vsyncpa [#allocation4], 1
    %s828 = scalar_lea.sflag [#allocation4], 1
    %829 = vsyncpa %s828, 1
    %830 = vsyncpa [#allocation10], 1
    %s831 = scalar_lea.sflag [#allocation10], 1
    %832 = vsyncpa %s831, 1

</llo_original>
